<compile_context>
chip_gen: v7x
topology: tpu7x:2x2x1
jax: 0.10.0
libtpu: 0.0.40
codegen_flags: <defaults>
</compile_context>

<pallas_src>
import math

import jax
import jax.numpy as jnp
from jax.experimental import pallas as pl
from jax.experimental.pallas import tpu as pltpu

HEADS = 4


# ----------------------------------------------------------------------------
# Helpers: VMEM budget + tile selection
# ----------------------------------------------------------------------------
def _vmem_limit_bytes():
    """~75% of physical VMEM, capped at 100 MiB (v5e/v6e ~96 MiB, v7x ~48 MiB)."""
    try:
        cap = int(pltpu.get_tpu_info().vmem_capacity_bytes)
    except Exception:
        cap = 64 * 1024 * 1024
    return min(cap * 3 // 4, 100 * 1024 * 1024)


def _divisor_tile(n, target):
    """Largest multiple of 128 that divides n and is <= max(target, 128)."""
    t = min(target, n)
    t -= t % 128
    t = max(t, 128)
    while n % t:
        t -= 128
    return t


def _row_tile(n, target):
    """Row tile for 'parallel' grid axes; keep >= 2 tiles so both v7x TCs get work."""
    if n >= 256:
        target = min(target, n // 2)
    return _divisor_tile(n, target)


# ----------------------------------------------------------------------------
# Kernel 1: fused Q|K|V projection
#   x: (TR, D) bf16, wqkv: (D, 3D) bf16, bqkv: (1, 3D) f32
#   outputs: q/k/v (TR, D) bf16, lane-dense (heads as 32-column groups);
#   q is pre-scaled by 1/sqrt(dh) via the folded Wq/bq.
# ----------------------------------------------------------------------------
def qkv_kernel(x_ref, w_ref, b_ref, q_ref, k_ref, v_ref):
    d = q_ref.shape[1]
    y = jnp.dot(x_ref[...], w_ref[...],
                preferred_element_type=jnp.float32) + b_ref[...]      # (TR, 3D) f32
    q_ref[...] = y[:, :d].astype(q_ref.dtype)
    k_ref[...] = y[:, d:2 * d].astype(k_ref.dtype)
    v_ref[...] = y[:, 2 * d:].astype(v_ref.dtype)


def qkv_project(x_bf, wqkv, bqkv, *, tr, vmem_limit):
    n, d = x_bf.shape
    assert n % tr == 0, (n, tr)
    out = jax.ShapeDtypeStruct((n, d), jnp.bfloat16)
    o_spec = pl.BlockSpec((tr, d), lambda i: (i, 0))
    return pl.pallas_call(
        qkv_kernel,
        out_shape=(out, out, out),
        grid_spec=pltpu.PrefetchScalarGridSpec(
            num_scalar_prefetch=0,
            grid=(n // tr,),
            in_specs=[pl.BlockSpec((tr, d), lambda i: (i, 0)),
                      pl.BlockSpec((d, 3 * d), lambda i: (0, 0)),
                      pl.BlockSpec((1, 3 * d), lambda i: (0, 0))],
            out_specs=(o_spec, o_spec, o_spec)),
        compiler_params=pltpu.CompilerParams(
            dimension_semantics=("parallel",),
            vmem_limit_bytes=vmem_limit),
    )(x_bf, wqkv, bqkv)


# ----------------------------------------------------------------------------
# Kernel 2: flash attention (online softmax) + fused full-depth output projection
#   q: (TQ, D) bf16 (pre-scaled), k/v: (TK, D) bf16 (TK = N when resident),
#   wo: (D, D) bf16, bo: (1, D) f32  ->  att: (TQ, D) bf16
# ----------------------------------------------------------------------------
def flash_kernel(q_ref, k_ref, v_ref, wo_ref, bo_ref, out_ref, m_sc, l_sc, acc_sc):
    ki = pl.program_id(1)
    d = q_ref.shape[1]
    dh = d // HEADS

    @pl.when(ki == 0)
    def _init():
        m_sc[...] = jnp.full_like(m_sc, -jnp.inf)
        l_sc[...] = jnp.zeros_like(l_sc)
        acc_sc[...] = jnp.zeros_like(acc_sc)

    q = q_ref[...]                                            # (TQ, D) bf16
    k = k_ref[...]                                            # (TK, D) bf16
    v = v_ref[...]                                            # (TK, D) bf16

    for h in range(HEADS):                                    # static unroll over 4 heads
        c0 = h * dh
        qh = q[:, c0:c0 + dh]                                 # (TQ, dh)
        kh = k[:, c0:c0 + dh]                                 # (TK, dh)
        vh = v[:, c0:c0 + dh]                                 # (TK, dh)
        s = jnp.einsum('qd,kd->qk', qh, kh,
                       preferred_element_type=jnp.float32)    # (TQ, TK) f32
        m_prev = m_sc[h]                                      # (TQ, 1)
        m_new = jnp.maximum(m_prev, jnp.max(s, axis=-1, keepdims=True))
        alpha = jnp.exp(m_prev - m_new)
        p = jnp.exp(s - m_new)
        l_sc[h] = alpha * l_sc[h] + jnp.sum(p, axis=-1, keepdims=True)
        acc_sc[h] = alpha * acc_sc[h] + jnp.dot(
            p.astype(v.dtype), vh, preferred_element_type=jnp.float32)
        m_sc[h] = m_new

    @pl.when(ki == pl.num_programs(1) - 1)
    def _finalize():
        heads_out = [(acc_sc[h] / l_sc[h]).astype(jnp.bfloat16) for h in range(HEADS)]
        o2d = jnp.concatenate(heads_out, axis=1)              # (TQ, D) lane-dense
        proj = jnp.dot(o2d, wo_ref[...],
                       preferred_element_type=jnp.float32) + bo_ref[...]
        out_ref[...] = proj.astype(out_ref.dtype)


def flash_attention(q, k, v, wo, bo, *, tq, vmem_limit):
    n, d = q.shape
    dh = d // HEADS
    assert n % tq == 0, (n, tq)
    # K/V VMEM residency: with a single kv block the block index never changes, so the
    # pipeline fetches K/V exactly once (no re-stream per q tile).
    resident_bytes = 2 * n * d * 2 + HEADS * tq * n * 4       # K+V bf16 + worst-case S f32
    tk = n if resident_bytes <= vmem_limit // 4 else _divisor_tile(n, 512)
    assert n % tk == 0, (n, tk)
    return pl.pallas_call(
        flash_kernel,
        out_shape=jax.ShapeDtypeStruct((n, d), jnp.bfloat16),
        grid_spec=pltpu.PrefetchScalarGridSpec(
            num_scalar_prefetch=0,
            grid=(n // tq, n // tk),
            in_specs=[pl.BlockSpec((tq, d), lambda qi, ki: (qi, 0)),
                      pl.BlockSpec((tk, d), lambda qi, ki: (ki, 0)),
                      pl.BlockSpec((tk, d), lambda qi, ki: (ki, 0)),
                      pl.BlockSpec((d, d), lambda qi, ki: (0, 0)),
                      pl.BlockSpec((1, d), lambda qi, ki: (0, 0))],
            out_specs=pl.BlockSpec((tq, d), lambda qi, ki: (qi, 0)),
            scratch_shapes=[pltpu.VMEM((HEADS, tq, 1), jnp.float32),
                            pltpu.VMEM((HEADS, tq, 1), jnp.float32),
                            pltpu.VMEM((HEADS, tq, dh), jnp.float32)]),
        compiler_params=pltpu.CompilerParams(
            dimension_semantics=("parallel", "arbitrary"),
            vmem_limit_bytes=vmem_limit),
    )(q, k, v, wo, bo)


def att_forward(feats_bf, params, *, tr, tq, vmem_limit):
    n, d = feats_bf.shape
    dh = d // HEADS
    scale = 1.0 / math.sqrt(dh)
    # Fold the softmax scale into the Q projection; fuse Q|K|V into one (D, 3D) weight.
    wqkv = jnp.concatenate([params["wq"] * scale, params["wk"], params["wv"]],
                           axis=1).astype(jnp.bfloat16)
    bqkv = jnp.concatenate([params["bq"] * scale, params["bk"], params["bv"]],
                           axis=1).astype(jnp.float32)
    q, k, v = qkv_project(feats_bf, wqkv, bqkv, tr=tr, vmem_limit=vmem_limit)
    wo = params["wo"].astype(jnp.bfloat16)
    bo = params["bo"].astype(jnp.float32)
    return flash_attention(q, k, v, wo, bo, tq=tq, vmem_limit=vmem_limit)


# ----------------------------------------------------------------------------
# Kernel 3: fused GALayer main path with zero-block (bipartite quadrant) skipping
#   hot loop : acc(tm, 2D) += L_tile(tm,tkr) @ [feats | att_feats](tkr, 2D)
#   finalize : relu((acc[:, :D] + sl*feats) @ W1 + b1) + relu(acc[:, D:] @ W2 + b2)
# ----------------------------------------------------------------------------
def ga_kernel(kmap_ref, l_ref, fa_ref, fs_ref, w1_ref, b1_ref, w2_ref, b2_ref,
              out_ref, acc_ref):
    j = pl.program_id(1)

    @pl.when(j == 0)
    def _init():
        acc_ref[...] = jnp.zeros_like(acc_ref)

    # One L-tile read feeds BOTH branches through the merged (tkr, 2D) RHS.
    acc_ref[...] += jnp.dot(l_ref[...], fa_ref[...],
                            preferred_element_type=jnp.float32)

    @pl.when(j == pl.num_programs(1) - 1)
    def _finalize():
        d = fs_ref.shape[1]
        acc = acc_ref[...]
        m1 = acc[:, :d] + fs_ref[...]            # fold diagonal self-loop: + diag*feats
        h1 = jnp.dot(m1, w1_ref[...], preferred_element_type=jnp.float32) + b1_ref[...]
        h2 = jnp.dot(acc[:, d:], w2_ref[...],
                     preferred_element_type=jnp.float32) + b2_ref[...]
        out_ref[...] = (jnp.maximum(h1, 0.0) + jnp.maximum(h2, 0.0)).astype(out_ref.dtype)


def ga_main_forward(laplacian, fa_bf, sl_feats_bf, w1, b1, w2, b2, *, tm, tkr, vmem_limit):
    n, d2 = fa_bf.shape
    d = d2 // 2
    out_dim = w1.shape[1]
    assert n % tm == 0 and n % tkr == 0, (n, tm, tkr)
    ni, nk = n // tm, n // tkr
    l_bf = laplacian.astype(jnp.bfloat16)

    # Block-nonzero map: per row-block, the column-block ids of nonzero L tiles,
    # padded (if needed) with ids of zero tiles -> padding contributes exactly 0,
    # so this stays correct for arbitrary laplacians while skipping the all-zero
    # user-user / item-item quadrants of a bipartite graph.
    blk_nz = jnp.abs(laplacian).reshape(ni, tm, nk, tkr).sum(axis=(1, 3)) > 0.0
    counts = jnp.sum(blk_nz.astype(jnp.int32), axis=1)
    max_cnt = max(int(jnp.max(counts)), 1)       # host sync; wrapper is not jitted
    order = jnp.argsort(jnp.logical_not(blk_nz).astype(jnp.int32), axis=1)
    kmap = order[:, :max_cnt].reshape(-1).astype(jnp.int32)   # (ni * max_cnt,)

    def l_map(i, j, kmap_ref):
        return (i, kmap_ref[i * max_cnt + j])

    def fa_map(i, j, kmap_ref):
        return (kmap_ref[i * max_cnt + j], 0)

    return pl.pallas_call(
        ga_kernel,
        out_shape=jax.ShapeDtypeStruct((n, out_dim), jnp.float32),
        grid_spec=pltpu.PrefetchScalarGridSpec(
            num_scalar_prefetch=1,
            grid=(ni, max_cnt),
            in_specs=[pl.BlockSpec((tm, tkr), l_map),                        # L tile (bf16)
                      pl.BlockSpec((tkr, d2), fa_map),                       # feats||att (bf16)
                      pl.BlockSpec((tm, d), lambda i, j, kmap_ref: (i, 0)),  # diag*feats row (bf16)
                      pl.BlockSpec((d, out_dim), lambda i, j, kmap_ref: (0, 0)),
                      pl.BlockSpec((1, out_dim), lambda i, j, kmap_ref: (0, 0)),
                      pl.BlockSpec((d, out_dim), lambda i, j, kmap_ref: (0, 0)),
                      pl.BlockSpec((1, out_dim), lambda i, j, kmap_ref: (0, 0))],
            out_specs=pl.BlockSpec((tm, out_dim), lambda i, j, kmap_ref: (i, 0)),
            scratch_shapes=[pltpu.VMEM((tm, d2), jnp.float32)]),
        compiler_params=pltpu.CompilerParams(
            dimension_semantics=("parallel", "arbitrary"),
            vmem_limit_bytes=vmem_limit),
    )(kmap, l_bf, fa_bf, sl_feats_bf, w1, b1, w2, b2)


# ----------------------------------------------------------------------------
# GALayer.forward
# ----------------------------------------------------------------------------
def galayer_forward(user_features, item_features, laplacian, self_loop, params,
                    *, tile_rows=512, tile_red=512):
    feats = jnp.concatenate([user_features, item_features], axis=0)      # (N, D) f32
    n, d = feats.shape
    assert n % 128 == 0 and d % HEADS == 0, (n, d)
    vmem_limit = _vmem_limit_bytes()

    tr = _row_tile(n, tile_rows)        # qkv row tile
    tq = _row_tile(n, tile_rows)        # flash q tile
    tm = _row_tile(n, tile_rows)        # ga row tile
    tkr = _divisor_tile(n, tile_red)    # ga reduction tile

    feats_bf = feats.astype(jnp.bfloat16)
    att_bf = att_forward(feats_bf, params, tr=tr, tq=tq, vmem_limit=vmem_limit)  # (N, D) bf16
    fa_bf = jnp.concatenate([feats_bf, att_bf], axis=1)                  # (N, 2D) bf16

    # TODO(synk): self_loop is assumed DIAGONAL (GACF passes the identity from
    # getSparseEye); it is folded in-kernel as "+ diag(self_loop) * feats".
    sl_feats_bf = (jnp.diagonal(self_loop)[:, None] * feats).astype(jnp.bfloat16)

    return ga_main_forward(laplacian, fa_bf, sl_feats_bf,
                           params["w1"], params["b1"], params["w2"], params["b2"],
                           tm=tm, tkr=tkr, vmem_limit=vmem_limit)


# ----------------------------------------------------------------------------
# Pure-JAX reference (same assumed ATTLayer), used for a loose sanity check.
# ----------------------------------------------------------------------------
def _reference_forward(user_features, item_features, laplacian, self_loop, params):
    feats = jnp.concatenate([user_features, item_features], axis=0)
    d = feats.shape[1]
    dh = d // HEADS
    q = feats @ params["wq"] + params["bq"]
    k = feats @ params["wk"] + params["bk"]
    v = feats @ params["wv"] + params["bv"]

    def split(x):
        return x.reshape(-1, HEADS, dh).transpose(1, 0, 2)

    qh, kh, vh = split(q), split(k), split(v)
    s = jnp.einsum('hnd,hmd->hnm', qh, kh) / math.sqrt(dh)
    p = jax.nn.softmax(s, axis=-1)
    o = jnp.einsum('hnm,hmd->hnd', p, vh)
    att = o.transpose(1, 0, 2).reshape(-1, d) @ params["wo"] + params["bo"]
    f1 = jax.nn.relu(((laplacian + self_loop) @ feats) @ params["w1"] + params["b1"])
    f2 = jax.nn.relu((laplacian @ att) @ params["w2"] + params["b2"])
    return f1 + f2


# ----------------------------------------------------------------------------
# Deterministic parameter init (xavier_uniform like the module's _init_weight_)
# ----------------------------------------------------------------------------
def xavier_uniform(key, out_features, in_features):
    bound = math.sqrt(6.0 / (in_features + out_features))
    # PyTorch Linear weight is (out, in); we store the transpose (in, out).
    w = jax.random.uniform(key, (out_features, in_features), jnp.float32, -bound, bound)
    return w.T


if __name__ == "__main__":
    n_users, n_items = 128, 128
    input_dim, out_dim = 128, 128
    N = n_users + n_items

    key = jax.random.PRNGKey(0)
    keys = jax.random.split(key, 10)

    user_features = jax.random.normal(keys[0], (n_users, input_dim), jnp.float32)
    item_features = jax.random.normal(keys[1], (n_items, input_dim), jnp.float32)

    # Bipartite user-item graph, symmetrically normalized adjacency
    # (dense stand-in for the sparse laplacianMat).
    R = (jax.random.uniform(keys[2], (n_users, n_items)) < 0.1).astype(jnp.float32)
    A = jnp.zeros((N, N), jnp.float32)
    A = A.at[:n_users, n_users:].set(R)
    A = A.at[n_users:, :n_users].set(R.T)
    deg = jnp.sum(A, axis=1)
    dinv = jnp.where(deg > 0, 1.0 / jnp.sqrt(jnp.maximum(deg, 1e-12)), 0.0)
    laplacian = dinv[:, None] * A * dinv[None, :]
    self_loop = jnp.eye(N, dtype=jnp.float32)

    params = {
        # affine1 / affine2 (xavier weights, zero bias — as in _init_weight_)
        "w1": xavier_uniform(keys[3], out_dim, input_dim),
        "b1": jnp.zeros((1, out_dim), jnp.float32),
        "w2": xavier_uniform(keys[4], out_dim, input_dim),
        "b2": jnp.zeros((1, out_dim), jnp.float32),
        # ATTLayer projections
        "wq": xavier_uniform(keys[5], input_dim, input_dim),
        "wk": xavier_uniform(keys[6], input_dim, input_dim),
        "wv": xavier_uniform(keys[7], input_dim, input_dim),
        "wo": xavier_uniform(keys[8], input_dim, input_dim),
        "bq": jnp.zeros((1, input_dim), jnp.float32),
        "bk": jnp.zeros((1, input_dim), jnp.float32),
        "bv": jnp.zeros((1, input_dim), jnp.float32),
        "bo": jnp.zeros((1, input_dim), jnp.float32),
    }

    # tile_red=128 at this small N exercises the bipartite zero-quadrant skip
    # (each row block visits only 1 of 2 L column blocks).
    out = galayer_forward(user_features, item_features, laplacian, self_loop, params,
                          tile_red=128)
    out = jax.block_until_ready(out)
    assert out.shape == (N, out_dim)

    # Loose sanity check vs f32 reference (kernels use bf16 matmul operands).
    ref = _reference_forward(user_features, item_features, laplacian, self_loop, params)
    err = float(jnp.max(jnp.abs(out - ref)))
    scale = float(jnp.max(jnp.abs(ref))) + 1e-6
    assert err < 0.1 * scale, f"mismatch: max_abs_err={err}, ref_scale={scale}"

    print("KERNEL_OK")
</pallas_src>

<mosaic_0001>
module attributes {stable_mosaic.version = 11 : i64} {
  func.func @qkv_kernel(%arg0: i32, %arg1: memref<128x128xbf16, #tpu.memory_space<vmem>>, %arg2: memref<128x384xbf16, #tpu.memory_space<vmem>>, %arg3: memref<1x384xf32, #tpu.memory_space<vmem>>, %arg4: memref<128x128xbf16, #tpu.memory_space<vmem>>, %arg5: memref<128x128xbf16, #tpu.memory_space<vmem>>, %arg6: memref<128x128xbf16, #tpu.memory_space<vmem>>) attributes {dimension_semantics = [#tpu.dimension_semantics<parallel>], iteration_bounds = array<i64: 2>, scalar_prefetch = 0 : i64, scratch_operands = 0 : i64, tpu.core_type = #tpu.core_type<tc>, window_params = [{transform_indices = @transform_0, window_bounds = array<i64: 128, 128>}, {pipeline_mode = #tpu.pipeline_mode<synchronous>, transform_indices = @transform_1, window_bounds = array<i64: 128, 384>}, {pipeline_mode = #tpu.pipeline_mode<synchronous>, transform_indices = @transform_2, window_bounds = array<i64: 1, 384>}, {transform_indices = @transform_3, window_bounds = array<i64: 128, 128>}, {transform_indices = @transform_4, window_bounds = array<i64: 128, 128>}, {transform_indices = @transform_5, window_bounds = array<i64: 128, 128>}]} {
    %c0 = arith.constant 0 : index
    %c0_0 = arith.constant 0 : index
    %0 = vector.load %arg1[%c0, %c0_0] : memref<128x128xbf16, #tpu.memory_space<vmem>>, vector<128x128xbf16>
    %c0_1 = arith.constant 0 : index
    %c0_2 = arith.constant 0 : index
    %1 = vector.load %arg2[%c0_1, %c0_2] : memref<128x384xbf16, #tpu.memory_space<vmem>>, vector<128x384xbf16>
    %cst = arith.constant dense<0.000000e+00> : vector<128x384xf32>
    %2 = tpu.matmul %0, %1, %cst {dimension_numbers = #tpu.dot_dimension_numbers<[1], [0], [0], [1], [0, 0, 1, 1], [], []>} : vector<128x128xbf16>, vector<128x384xbf16>, vector<128x384xf32> -> vector<128x384xf32>
    %c0_3 = arith.constant 0 : index
    %c0_4 = arith.constant 0 : index
    %3 = vector.load %arg3[%c0_3, %c0_4] : memref<1x384xf32, #tpu.memory_space<vmem>>, vector<1x384xf32>
    %4 = vector.broadcast %3 : vector<1x384xf32> to vector<128x384xf32>
    %5 = arith.addf %2, %4 : vector<128x384xf32>
    %6 = vector.extract_strided_slice %5 {offsets = [0, 0], sizes = [128, 128], strides = [1, 1]} : vector<128x384xf32> to vector<128x128xf32>
    %7 = arith.truncf %6 : vector<128x128xf32> to vector<128x128xbf16>
    %c0_5 = arith.constant 0 : index
    %c0_6 = arith.constant 0 : index
    %8 = vector.load %arg4[%c0_5, %c0_6] : memref<128x128xbf16, #tpu.memory_space<vmem>>, vector<128x128xbf16>
    tpu.vector_store %arg4[%c0_5, %c0_6], %7 {strides = array<i32>} : memref<128x128xbf16, #tpu.memory_space<vmem>>, vector<128x128xbf16>,
    %9 = vector.extract_strided_slice %5 {offsets = [0, 128], sizes = [128, 128], strides = [1, 1]} : vector<128x384xf32> to vector<128x128xf32>
    %10 = arith.truncf %9 : vector<128x128xf32> to vector<128x128xbf16>
    %c0_7 = arith.constant 0 : index
    %c0_8 = arith.constant 0 : index
    %11 = vector.load %arg5[%c0_7, %c0_8] : memref<128x128xbf16, #tpu.memory_space<vmem>>, vector<128x128xbf16>
    tpu.vector_store %arg5[%c0_7, %c0_8], %10 {strides = array<i32>} : memref<128x128xbf16, #tpu.memory_space<vmem>>, vector<128x128xbf16>,
    %12 = vector.extract_strided_slice %5 {offsets = [0, 256], sizes = [128, 128], strides = [1, 1]} : vector<128x384xf32> to vector<128x128xf32>
    %13 = arith.truncf %12 : vector<128x128xf32> to vector<128x128xbf16>
    %c0_9 = arith.constant 0 : index
    %c0_10 = arith.constant 0 : index
    %14 = vector.load %arg6[%c0_9, %c0_10] : memref<128x128xbf16, #tpu.memory_space<vmem>>, vector<128x128xbf16>
    tpu.vector_store %arg6[%c0_9, %c0_10], %13 {strides = array<i32>} : memref<128x128xbf16, #tpu.memory_space<vmem>>, vector<128x128xbf16>,
    return
  }
  func.func @transform_0(%arg0: i32) -> (i32, i32) {
    %c0_i32 = arith.constant 0 : i32
    %c0_i32_0 = arith.constant 0 : i32
    return %arg0, %c0_i32 : i32, i32
  }
  func.func @transform_1(%arg0: i32) -> (i32, i32) {
    %c0_i32 = arith.constant 0 : i32
    %c0_i32_0 = arith.constant 0 : i32
    %c0_i32_1 = arith.constant 0 : i32
    return %c0_i32, %c0_i32_0 : i32, i32
  }
  func.func @transform_2(%arg0: i32) -> (i32, i32) {
    %c0_i32 = arith.constant 0 : i32
    %c0_i32_0 = arith.constant 0 : i32
    %c0_i32_1 = arith.constant 0 : i32
    return %c0_i32, %c0_i32_0 : i32, i32
  }
  func.func @transform_3(%arg0: i32) -> (i32, i32) {
    %c0_i32 = arith.constant 0 : i32
    %c0_i32_0 = arith.constant 0 : i32
    return %arg0, %c0_i32 : i32, i32
  }
  func.func @transform_4(%arg0: i32) -> (i32, i32) {
    %c0_i32 = arith.constant 0 : i32
    %c0_i32_0 = arith.constant 0 : i32
    return %arg0, %c0_i32 : i32, i32
  }
  func.func @transform_5(%arg0: i32) -> (i32, i32) {
    %c0_i32 = arith.constant 0 : i32
    %c0_i32_0 = arith.constant 0 : i32
    return %arg0, %c0_i32 : i32, i32
  }
}

</mosaic_0001>

<llo_original>
// kernel: tpu_custom_call.1
$region0: #{tpu_custom_call.1}
  #allocation0 [shape = 'u32[]', space=smem, size = 0x4, offset = 0x4, fixed_abs, tag = 'smem constant byte address 0x4 - core index']
  #allocation1 [shape = 'u32[144,128]{1,0:T(1,128)}', space=vmem, size = 0x12000, scoped, tag = 'internal scratch']
  %s0 = inlined_call_operand.hbm [shape: bf16[256,128], index: 0, kind: input, shape index: {}]
  %s1 = inlined_call_operand.hbm [shape: bf16[128,384], index: 1, kind: input, shape index: {}]
  %s2 = inlined_call_operand.vmem [shape: f32[1,384], index: 2, kind: input, shape index: {}]
  %s3 = inlined_call_operand.hbm [shape: bf16[256,128], index: 3, kind: output, shape index: {0}]
  %s4 = inlined_call_operand.hbm [shape: bf16[256,128], index: 4, kind: output, shape index: {1}]
  %s5 = inlined_call_operand.hbm [shape: bf16[256,128], index: 5, kind: output, shape index: {2}]
  %6 = xla_tuple %s3, %s4, %s5
  %s7 = sld [smem:[#allocation0]]
  $region69: #{tpu_custom_call.1} parent=0
    _
  %s9 = ssub.s32 1, %s7
  %s10 = scalar_select 0, %s9, %s7
  $region1: #{tpu_custom_call.1} parent=0
    #allocation2 [shape = 'u8[65536]{0}', space=vmem, size = 0x10000, scoped, tag = 'input window, operand 0']
    #allocation3 [shape = 's32[2]{0}', space=sflag, size = 0x8, scoped, tag = 'scoped memory for tpu_custom_call.1']
    #allocation4 [shape = 's32[2]{0}', space=sflag, size = 0x8, scoped, tag = 'scoped memory for tpu_custom_call.1']
    #allocation5 [shape = 'u8[98304]{0}', space=vmem, size = 0x18000, scoped, tag = 'input window, operand 1, single buffered']
    #allocation6 [shape = 's32[1]{0}', space=sflag, size = 0x4, scoped, tag = 'scoped memory for tpu_custom_call.1']
    #allocation7 [shape = 'u8[65536]{0}', space=vmem, size = 0x10000, scoped, tag = 'output window, operand 0']
    #allocation8 [shape = 'u8[65536]{0}', space=vmem, size = 0x10000, scoped, tag = 'output window, operand 1']
    #allocation9 [shape = 's32[2]{0}', space=sflag, size = 0x8, scoped, tag = 'scoped memory for tpu_custom_call.1']
    #allocation10 [shape = 'u8[65536]{0}', space=vmem, size = 0x10000, scoped, tag = 'output window, operand 2']
    %11 = vsyncpa [#allocation3], 0
    %s12 = scalar_lea.sflag [#allocation3], 1
    %13 = vsyncpa %s12, 0
    %14 = vsyncpa [#allocation6], 0
    %15 = vsyncpa [#allocation4], 0
    %s16 = scalar_lea.sflag [#allocation4], 1
    %17 = vsyncpa %s16, 0
    %18 = vsyncpa [#allocation9], 0
    %s19 = scalar_lea.sflag [#allocation9], 1
    %20 = vsyncpa %s19, 0
    loop: start=0, step=1, limit=4
    $region2: #{tpu_custom_call.1} parent=1 // loop_pre_header
      _
    $region3: #{tpu_custom_call.1} parent=1 // loop_header
      %s22 = sphi 0, %s26
      %p23 = scmp.ge.s32.totalorder %s22, 4
      %s32 = sphi 0, %s34
      %s35 = sphi 0, %s32
      %s36 = sphi 0, %s35
      %s52 = sphi 0, %s36
      %s56 = sphi 0, %s56
      %s58 = sphi 0, %s56
      %s59 = sphi 0, %s58
      %s73 = sphi 0, %s59
      %s77 = sphi 0, %s77
      %s79 = sphi 0, %s77
      %s80 = sphi 0, %s79
      %s94 = sphi 0, %s80
      %s100 = sphi 0, %s102
      %s103 = sphi 0, %s100
      %s104 = sphi 0, %s103
      %s120 = sphi 0, %s104
      %s126 = sphi 0, %s128
      %s129 = sphi 0, %s126
      %s130 = sphi 0, %s129
      %s146 = sphi 0, %s130
      %s152 = sphi 0, %s154
      %s155 = sphi 0, %s152
      %s156 = sphi 0, %s155
      %s172 = sphi 0, %s156
    $region4: #{tpu_custom_call.1} parent=1 // loop_header_branch
      %25 = sbr.rel (%p23) target = $region8
    $region5: #{tpu_custom_call.1} parent=1 // loop_body
      %s27 = ssub.s32 %s22, 1
      %s28 = ssub.s32 %s22, 2
      %s29 = sadd.s32 %s22, 1
      %s30 = ssub.s32 %s22, %s29
      %p31 = scmp.eq.s32.totalorder %s30, 0
      %s33 = sadd.s32 %s32, 1
      %s34 = scalar_select %p31, %s32, %s33
      %p37 = pneg %p31
      %p38 = scmp.eq.s32.totalorder %s22, 1
      %p39 = por %p37, %p38
      %p40 = scmp.ne.s32.totalorder %s32, %s35
      %p41 = scmp.eq.s32.totalorder %s22, 0
      %p42 = por %p40, %p41
      %p43 = scmp.ne.s32.totalorder %s32, %s35
      %p44 = scmp.eq.s32.totalorder %s27, 1
      %p45 = por %p43, %p44
      %p46 = scmp.ne.s32.totalorder %s35, %s36
      %p47 = scmp.eq.s32.totalorder %s27, 0
      %p48 = por %p46, %p47
      %p49 = scmp.ne.s32.totalorder %s35, %s36
      %p50 = scmp.eq.s32.totalorder %s28, 1
      %p51 = por %p49, %p50
      %p53 = scmp.ne.s32.totalorder %s36, %s52
      %p54 = scmp.eq.s32.totalorder %s28, 0
      %p55 = por %p53, %p54
      %s57 = sadd.s32 %s56, 1
      %p60 = scmp.eq.s32.totalorder %s22, 1
      %p61 = scmp.ne.s32.totalorder %s56, %s58
      %p62 = scmp.eq.s32.totalorder %s22, 0
      %p63 = por %p61, %p62
      %p64 = scmp.ne.s32.totalorder %s56, %s58
      %p65 = scmp.eq.s32.totalorder %s27, 1
      %p66 = por %p64, %p65
      %p67 = scmp.ne.s32.totalorder %s58, %s59
      %p68 = scmp.eq.s32.totalorder %s27, 0
      %p69 = por %p67, %p68
      %p70 = scmp.ne.s32.totalorder %s58, %s59
      %p71 = scmp.eq.s32.totalorder %s28, 1
      %p72 = por %p70, %p71
      %p74 = scmp.ne.s32.totalorder %s59, %s73
      %p75 = scmp.eq.s32.totalorder %s28, 0
      %p76 = por %p74, %p75
      %s78 = sadd.s32 %s77, 1
      %p81 = scmp.eq.s32.totalorder %s22, 1
      %p82 = scmp.ne.s32.totalorder %s77, %s79
      %p83 = scmp.eq.s32.totalorder %s22, 0
      %p84 = por %p82, %p83
      %p85 = scmp.ne.s32.totalorder %s77, %s79
      %p86 = scmp.eq.s32.totalorder %s27, 1
      %p87 = por %p85, %p86
      %p88 = scmp.ne.s32.totalorder %s79, %s80
      %p89 = scmp.eq.s32.totalorder %s27, 0
      %p90 = por %p88, %p89
      %p91 = scmp.ne.s32.totalorder %s79, %s80
      %p92 = scmp.eq.s32.totalorder %s28, 1
      %p93 = por %p91, %p92
      %p95 = scmp.ne.s32.totalorder %s80, %s94
      %p96 = scmp.eq.s32.totalorder %s28, 0
      %p97 = por %p95, %p96
      %s98 = ssub.s32 %s22, %s29
      %p99 = scmp.eq.s32.totalorder %s98, 0
      %s101 = sadd.s32 %s100, 1
      %s102 = scalar_select %p99, %s100, %s101
      %p105 = pneg %p99
      %p106 = scmp.eq.s32.totalorder %s22, 1
      %p107 = por %p105, %p106
      %p108 = scmp.ne.s32.totalorder %s100, %s103
      %p109 = scmp.eq.s32.totalorder %s22, 0
      %p110 = por %p108, %p109
      %p111 = scmp.ne.s32.totalorder %s100, %s103
      %p112 = scmp.eq.s32.totalorder %s27, 1
      %p113 = por %p111, %p112
      %p114 = scmp.ne.s32.totalorder %s103, %s104
      %p115 = scmp.eq.s32.totalorder %s27, 0
      %p116 = por %p114, %p115
      %p117 = scmp.ne.s32.totalorder %s103, %s104
      %p118 = scmp.eq.s32.totalorder %s28, 1
      %p119 = por %p117, %p118
      %p121 = scmp.ne.s32.totalorder %s104, %s120
      %p122 = scmp.eq.s32.totalorder %s28, 0
      %p123 = por %p121, %p122
      %s124 = ssub.s32 %s22, %s29
      %p125 = scmp.eq.s32.totalorder %s124, 0
      %s127 = sadd.s32 %s126, 1
      %s128 = scalar_select %p125, %s126, %s127
      %p131 = pneg %p125
      %p132 = scmp.eq.s32.totalorder %s22, 1
      %p133 = por %p131, %p132
      %p134 = scmp.ne.s32.totalorder %s126, %s129
      %p135 = scmp.eq.s32.totalorder %s22, 0
      %p136 = por %p134, %p135
      %p137 = scmp.ne.s32.totalorder %s126, %s129
      %p138 = scmp.eq.s32.totalorder %s27, 1
      %p139 = por %p137, %p138
      %p140 = scmp.ne.s32.totalorder %s129, %s130
      %p141 = scmp.eq.s32.totalorder %s27, 0
      %p142 = por %p140, %p141
      %p143 = scmp.ne.s32.totalorder %s129, %s130
      %p144 = scmp.eq.s32.totalorder %s28, 1
      %p145 = por %p143, %p144
      %p147 = scmp.ne.s32.totalorder %s130, %s146
      %p148 = scmp.eq.s32.totalorder %s28, 0
      %p149 = por %p147, %p148
      %s150 = ssub.s32 %s22, %s29
      %p151 = scmp.eq.s32.totalorder %s150, 0
      %s153 = sadd.s32 %s152, 1
      %s154 = scalar_select %p151, %s152, %s153
      %p157 = pneg %p151
      %p158 = scmp.eq.s32.totalorder %s22, 1
      %p159 = por %p157, %p158
      %p160 = scmp.ne.s32.totalorder %s152, %s155
      %p161 = scmp.eq.s32.totalorder %s22, 0
      %p162 = por %p160, %p161
      %p163 = scmp.ne.s32.totalorder %s152, %s155
      %p164 = scmp.eq.s32.totalorder %s27, 1
      %p165 = por %p163, %p164
      %p166 = scmp.ne.s32.totalorder %s155, %s156
      %p167 = scmp.eq.s32.totalorder %s27, 0
      %p168 = por %p166, %p167
      %p169 = scmp.ne.s32.totalorder %s155, %s156
      %p170 = scmp.eq.s32.totalorder %s28, 1
      %p171 = por %p169, %p170
      %p173 = scmp.ne.s32.totalorder %s156, %s172
      %p174 = scmp.eq.s32.totalorder %s28, 0
      %p175 = por %p173, %p174
      %p176 = scmp.le.s32.totalorder 1, %s22
      %p177 = scmp.lt.s32.totalorder %s22, 3
      %p178 = pnand %p176, %p177
      %p179 = pneg %p178
      // Predicated region
      $region9: #{tpu_custom_call.1} parent=5 // pred_check
        _
      $region10: #{tpu_custom_call.1} parent=5 // pred_check_branch
        %181 = sbr.rel (%p178) target = $region12
      $region11: #{tpu_custom_call.1} parent=5 // pred_region
        %s182 = ssub.s32 %s22, 1
        // Predicated region
        $region13: #{tpu_custom_call.1} parent=11 // pred_check
          %p183 = pneg %p69
        $region14: #{tpu_custom_call.1} parent=11 // pred_check_branch
          %185 = sbr.rel (%p183) target = $region16
        $region15: #{tpu_custom_call.1} parent=11 // pred_region
          %s187 = ssub.s32 3072, 3072
          %188 = vsyncadd [#allocation6], %s187
          %s189 = sshll.u32 [#allocation5], 4
          %s190 = int_to_ptr.vmem [resolvable:$true] %s189
          %195 = dma.hbm_to_vmem [thread:$0]  %s1, 3072, %s190, [#allocation6], 192, 192, 12
        $region16: #{tpu_custom_call.1} parent=11 // pred_fallthru
          _
        // Predicated region
        $region17: #{tpu_custom_call.1} parent=11 // pred_check
          %p196 = pneg %p90
        $region18: #{tpu_custom_call.1} parent=11 // pred_check_branch
          %198 = sbr.rel (%p196) target = $region20
        $region19: #{tpu_custom_call.1} parent=11 // pred_region
          _
        $region20: #{tpu_custom_call.1} parent=11 // pred_fallthru
          _
      $region12: #{tpu_custom_call.1} parent=5 // pred_fallthru
        _
      %p199 = scmp.lt.s32.totalorder %s22, 2
      // Predicated region
      $region21: #{tpu_custom_call.1} parent=5 // pred_check
        %p200 = pneg %p199
      $region22: #{tpu_custom_call.1} parent=5 // pred_check_branch
        %202 = sbr.rel (%p200) target = $region24
      $region23: #{tpu_custom_call.1} parent=5 // pred_region
        // Predicated region
        $region25: #{tpu_custom_call.1} parent=23 // pred_check
          %p203 = pneg %p42
        $region26: #{tpu_custom_call.1} parent=23 // pred_check_branch
          %205 = sbr.rel (%p203) target = $region28
        $region27: #{tpu_custom_call.1} parent=23 // pred_region
          %s206 = sand.u32 %s32, 1
          %s207 = scalar_lea.sflag [#allocation3], %s206
          %s208 = sand.u32 %s32, 1
          %s209 = smul.addr %s208, 64
          %s210 = scalar_lea.vmem [#allocation2], %s209
          %s211 = smul.u32 16, %s22
          %s213 = ssub.s32 1024, 1024
          %214 = vsyncadd %s207, %s213
          %s215 = smul.addr %s211, 64
          %s216 = scalar_lea.hbm %s0, %s215
          %s217 = sshll.u32 %s210, 4
          %s218 = int_to_ptr.vmem [resolvable:$true] %s217
          %223 = dma.hbm_to_vmem [thread:$0]  %s216, 1024, %s218, %s207, 64, 64, 4
        $region28: #{tpu_custom_call.1} parent=23 // pred_fallthru
          _
      $region24: #{tpu_custom_call.1} parent=5 // pred_fallthru
        _
      %p224 = scmp.le.s32.totalorder 1, %s22
      %p225 = scmp.lt.s32.totalorder %s22, 3
      %p226 = pnand %p224, %p225
      %p227 = pneg %p226
      // Predicated region
      $region29: #{tpu_custom_call.1} parent=5 // pred_check
        _
      $region30: #{tpu_custom_call.1} parent=5 // pred_check_branch
        %229 = sbr.rel (%p226) target = $region32
      $region31: #{tpu_custom_call.1} parent=5 // pred_region
        %s230 = ssub.s32 %s22, 1
        %s231 = sand.u32 %s35, 1
        %s232 = scalar_lea.sflag [#allocation3], %s231
        %s233 = sand.u32 %s35, 1
        %s234 = smul.addr %s233, 64
        %s235 = scalar_lea.vmem [#allocation2], %s234
        // Predicated region
        $region33: #{tpu_custom_call.1} parent=31 // pred_check
          %p236 = pneg %p48
        $region34: #{tpu_custom_call.1} parent=31 // pred_check_branch
          %238 = sbr.rel (%p236) target = $region36
        $region35: #{tpu_custom_call.1} parent=31 // pred_region
          %239 = dma.done %s232, 1024
        $region36: #{tpu_custom_call.1} parent=31 // pred_fallthru
          _
        // Predicated region
        $region37: #{tpu_custom_call.1} parent=31 // pred_check
          %p240 = pneg %p69
        $region38: #{tpu_custom_call.1} parent=31 // pred_check_branch
          %242 = sbr.rel (%p240) target = $region40
        $region39: #{tpu_custom_call.1} parent=31 // pred_region
          %243 = dma.done [#allocation6], 3072
        $region40: #{tpu_custom_call.1} parent=31 // pred_fallthru
          _
        %s244 = sand.u32 %s35, 1
        %s245 = scalar_lea.sflag [#allocation3], %s244
        %s246 = sand.u32 %s35, 1
        %s247 = smul.addr %s246, 64
        %s248 = scalar_lea.vmem [#allocation2], %s247
        %p249 = pneg %p48
        %p250 = pneg %p45
        %p251 = pneg %p69
        %p252 = pneg %p66
        %p253 = pneg %p90
        %p254 = pneg %p87
        %p255 = pneg %p116
        %p256 = pneg %p113
        %s257 = sand.u32 %s103, 1
        %s258 = scalar_lea.sflag [#allocation4], %s257
        %s259 = sand.u32 %s103, 1
        %s260 = smul.addr %s259, 64
        %s261 = scalar_lea.vmem [#allocation7], %s260
        %p262 = pneg %p142
        %p263 = pneg %p139
        %s264 = sand.u32 %s27, 1
        %s265 = scalar_lea.sflag [#allocation9], %s264
        %s266 = sand.u32 %s129, 1
        %s267 = smul.addr %s266, 64
        %s268 = scalar_lea.vmem [#allocation8], %s267
        %p269 = pneg %p168
        %p270 = pneg %p165
        %s271 = sand.u32 %s27, 1
        %s272 = scalar_lea.sflag [#allocation9], %s271
        %s273 = sand.u32 %s155, 1
        %s274 = smul.addr %s273, 64
        %s275 = scalar_lea.vmem [#allocation10], %s274
        %s276 = smul.u32 16, %s27
        %s277 = smul.u32 16, %s27
        %s278 = smul.u32 16, %s27
        %s279 = smul.u32 16, %s27
        %v281 = vld [vmem:[%s235] sm:$0xf]
        %v282 = vld [vmem:[%s235 + $0x4] sm:$0xf]
        %v283 = vld [vmem:[%s235 + $0x8] sm:$0xf]
        %v284 = vld [vmem:[%s235 + $0xc] sm:$0xf]
        %v285 = vld [vmem:[%s235 + $0x10] sm:$0xf]
        %v286 = vld [vmem:[%s235 + $0x14] sm:$0xf]
        %v287 = vld [vmem:[%s235 + $0x18] sm:$0xf]
        %v288 = vld [vmem:[%s235 + $0x1c] sm:$0xf]
        %v289 = vld [vmem:[%s235 + $0x20] sm:$0xf]
        %v290 = vld [vmem:[%s235 + $0x24] sm:$0xf]
        %v291 = vld [vmem:[%s235 + $0x28] sm:$0xf]
        %v292 = vld [vmem:[%s235 + $0x2c] sm:$0xf]
        %v293 = vld [vmem:[%s235 + $0x30] sm:$0xf]
        %v294 = vld [vmem:[%s235 + $0x34] sm:$0xf]
        %v295 = vld [vmem:[%s235 + $0x38] sm:$0xf]
        %v296 = vld [vmem:[%s235 + $0x3c] sm:$0xf]
        %v297 = vld [vmem:[#allocation5] sm:$0xff]
        %v298 = vld [vmem:[#allocation5 + $0x8] sm:$0xf]
        %v299 = vld [vmem:[#allocation5 + $0xc] sm:$0xff]
        %v300 = vld [vmem:[#allocation5 + $0x14] sm:$0xf]
        %v301 = vld [vmem:[#allocation5 + $0x18] sm:$0xff]
        %v302 = vld [vmem:[#allocation5 + $0x20] sm:$0xf]
        %v303 = vld [vmem:[#allocation5 + $0x24] sm:$0xff]
        %v304 = vld [vmem:[#allocation5 + $0x2c] sm:$0xf]
        %v305 = vld [vmem:[#allocation5 + $0x30] sm:$0xff]
        %v306 = vld [vmem:[#allocation5 + $0x38] sm:$0xf]
        %v307 = vld [vmem:[#allocation5 + $0x3c] sm:$0xff]
        %v308 = vld [vmem:[#allocation5 + $0x44] sm:$0xf]
        %v309 = vld [vmem:[#allocation5 + $0x48] sm:$0xff]
        %v310 = vld [vmem:[#allocation5 + $0x50] sm:$0xf]
        %v311 = vld [vmem:[#allocation5 + $0x54] sm:$0xff]
        %v312 = vld [vmem:[#allocation5 + $0x5c] sm:$0xf]
        %v313 = vld [vmem:[#allocation5 + $0x60] sm:$0xff]
        %v314 = vld [vmem:[#allocation5 + $0x68] sm:$0xf]
        %v315 = vld [vmem:[#allocation5 + $0x6c] sm:$0xff]
        %v316 = vld [vmem:[#allocation5 + $0x74] sm:$0xf]
        %v317 = vld [vmem:[#allocation5 + $0x78] sm:$0xff]
        %v318 = vld [vmem:[#allocation5 + $0x80] sm:$0xf]
        %v319 = vld [vmem:[#allocation5 + $0x84] sm:$0xff]
        %v320 = vld [vmem:[#allocation5 + $0x8c] sm:$0xf]
        %v321 = vld [vmem:[#allocation5 + $0x90] sm:$0xff]
        %v322 = vld [vmem:[#allocation5 + $0x98] sm:$0xf]
        %v323 = vld [vmem:[#allocation5 + $0x9c] sm:$0xff]
        %v324 = vld [vmem:[#allocation5 + $0xa4] sm:$0xf]
        %v325 = vld [vmem:[#allocation5 + $0xa8] sm:$0xff]
        %v326 = vld [vmem:[#allocation5 + $0xb0] sm:$0xf]
        %v327 = vld [vmem:[#allocation5 + $0xb4] sm:$0xff]
        %v328 = vld [vmem:[#allocation5 + $0xbc] sm:$0xf]
        %v329 = vld [vmem:[%s2] sm:$0x7]
        %v331 = vlaneseq
        %v332 = vshrl.u32 %v331, 7
        %v333 = vsub.s32 0, %v332
        %v334 = vrot.slane %v329, %v333
        %v335 = vlaneseq
        %v336 = vshrl.u32 %v335, 7
        %v337 = vsub.s32 1, %v336
        %v338 = vrot.slane %v329, %v337
        %v339 = vlaneseq
        %v340 = vshrl.u32 %v339, 7
        %v341 = vsub.s32 2, %v340
        %v342 = vrot.slane %v329, %v341
        %v362 = vunpack.c.l.b16 %v281
        %v363 = vunpack.c.l.b16 %v282
        %v364 = vunpack.c.l.b16 %v283
        %v365 = vunpack.c.l.b16 %v284
        %v366 = vunpack.c.l.b16 %v285
        %v367 = vunpack.c.l.b16 %v286
        %v368 = vunpack.c.l.b16 %v287
        %v369 = vunpack.c.l.b16 %v288
        %v370 = vunpack.c.l.b16 %v289
        %v371 = vunpack.c.l.b16 %v290
        %v372 = vunpack.c.l.b16 %v291
        %v373 = vunpack.c.l.b16 %v292
        %v374 = vunpack.c.l.b16 %v293
        %v375 = vunpack.c.l.b16 %v294
        %v376 = vunpack.c.l.b16 %v295
        %v377 = vunpack.c.l.b16 %v296
        %v378 = vpack.c.b16 %v363, %v362
        %v379 = vpack.c.b16 %v365, %v364
        %v380 = vpack.c.b16 %v367, %v366
        %v381 = vpack.c.b16 %v369, %v368
        %v382 = vpack.c.b16 %v371, %v370
        %v383 = vpack.c.b16 %v373, %v372
        %v384 = vpack.c.b16 %v375, %v374
        %v385 = vpack.c.b16 %v377, %v376
        %v426 = vunpack.c.l.b16 %v297
        %v427 = vunpack.c.h.b16 %v297
        %v428 = vunpack.c.l.b16 %v298
        %v429 = vunpack.c.l.b16 %v299
        %v430 = vunpack.c.h.b16 %v299
        %v431 = vunpack.c.l.b16 %v300
        %v432 = vunpack.c.l.b16 %v301
        %v433 = vunpack.c.h.b16 %v301
        %v434 = vunpack.c.l.b16 %v302
        %v435 = vunpack.c.l.b16 %v303
        %v436 = vunpack.c.h.b16 %v303
        %v437 = vunpack.c.l.b16 %v304
        %v438 = vunpack.c.l.b16 %v305
        %v439 = vunpack.c.h.b16 %v305
        %v440 = vunpack.c.l.b16 %v306
        %v441 = vunpack.c.l.b16 %v307
        %v442 = vunpack.c.h.b16 %v307
        %v443 = vunpack.c.l.b16 %v308
        %v444 = vunpack.c.l.b16 %v309
        %v445 = vunpack.c.h.b16 %v309
        %v446 = vunpack.c.l.b16 %v310
        %v447 = vunpack.c.l.b16 %v311
        %v448 = vunpack.c.h.b16 %v311
        %v449 = vunpack.c.l.b16 %v312
        %v450 = vunpack.c.l.b16 %v313
        %v451 = vunpack.c.h.b16 %v313
        %v452 = vunpack.c.l.b16 %v314
        %v453 = vunpack.c.l.b16 %v315
        %v454 = vunpack.c.h.b16 %v315
        %v455 = vunpack.c.l.b16 %v316
        %v456 = vunpack.c.l.b16 %v317
        %v457 = vunpack.c.h.b16 %v317
        %v458 = vunpack.c.l.b16 %v318
        %v459 = vunpack.c.l.b16 %v319
        %v460 = vunpack.c.h.b16 %v319
        %v461 = vunpack.c.l.b16 %v320
        %v462 = vunpack.c.l.b16 %v321
        %v463 = vunpack.c.h.b16 %v321
        %v464 = vunpack.c.l.b16 %v322
        %v465 = vunpack.c.l.b16 %v323
        %v466 = vunpack.c.h.b16 %v323
        %v467 = vunpack.c.l.b16 %v324
        %v468 = vunpack.c.l.b16 %v325
        %v469 = vunpack.c.h.b16 %v325
        %v470 = vunpack.c.l.b16 %v326
        %v471 = vunpack.c.l.b16 %v327
        %v472 = vunpack.c.h.b16 %v327
        %v473 = vunpack.c.l.b16 %v328
        %v474 = vpack.c.b16 %v429, %v426
        %v475 = vpack.c.b16 %v430, %v427
        %v476 = vpack.c.b16 %v431, %v428
        %v477 = vpack.c.b16 %v435, %v432
        %v478 = vpack.c.b16 %v436, %v433
        %v479 = vpack.c.b16 %v437, %v434
        %v480 = vpack.c.b16 %v441, %v438
        %v481 = vpack.c.b16 %v442, %v439
        %v482 = vpack.c.b16 %v443, %v440
        %v483 = vpack.c.b16 %v447, %v444
        %v484 = vpack.c.b16 %v448, %v445
        %v485 = vpack.c.b16 %v449, %v446
        %v486 = vpack.c.b16 %v453, %v450
        %v487 = vpack.c.b16 %v454, %v451
        %v488 = vpack.c.b16 %v455, %v452
        %v489 = vpack.c.b16 %v459, %v456
        %v490 = vpack.c.b16 %v460, %v457
        %v491 = vpack.c.b16 %v461, %v458
        %v492 = vpack.c.b16 %v465, %v462
        %v493 = vpack.c.b16 %v466, %v463
        %v494 = vpack.c.b16 %v467, %v464
        %v495 = vpack.c.b16 %v471, %v468
        %v496 = vpack.c.b16 %v472, %v469
        %v497 = vpack.c.b16 %v473, %v470
        %522 = vmatprep.subr.bf16.mxu0 %v475
        %523 = vmatpush1.bf16.msra.mxu0 %v474
        %524 = vmatprep.subr.bf16.mxu0 %v478
        %525 = vmatpush1.bf16.msra.mxu0 %v477
        %526 = vmatprep.subr.bf16.mxu0 %v481
        %527 = vmatpush1.bf16.msra.mxu0 %v480
        %528 = vmatprep.subr.bf16.mxu0 %v484
        %529 = vmatpush1.bf16.msra.mxu0 %v483
        %530 = vmatprep.subr.bf16.mxu0 %v487
        %531 = vmatpush1.bf16.msra.mxu0 %v486
        %532 = vmatprep.subr.bf16.mxu0 %v490
        %533 = vmatpush1.bf16.msra.mxu0 %v489
        %534 = vmatprep.subr.bf16.mxu0 %v493
        %535 = vmatpush1.bf16.msra.mxu0 %v492
        %536 = vmatprep.subr.bf16.mxu0 %v496
        %537 = vmatpush1.bf16.msra.mxu0 %v495
        %538 = vmatprep.subr.bf16.mxu0 0
        %539 = vmatpush1.bf16.msra.mxu0 0
        %540 = vmatprep.subr.bf16.mxu0 0
        %541 = vmatpush1.bf16.msra.mxu0 0
        %542 = vmatprep.subr.bf16.mxu0 0
        %543 = vmatpush1.bf16.msra.mxu0 0
        %544 = vmatprep.subr.bf16.mxu0 0
        %545 = vmatpush1.bf16.msra.mxu0 0
        %546 = vmatprep.subr.bf16.mxu0 0
        %547 = vmatpush1.bf16.msra.mxu0 0
        %548 = vmatprep.subr.bf16.mxu0 0
        %549 = vmatpush1.bf16.msra.mxu0 0
        %550 = vmatprep.subr.bf16.mxu0 0
        %551 = vmatpush1.bf16.msra.mxu0 0
        %552 = vmatprep.subr.bf16.mxu0 0
        %553 = vmatpush1.bf16.msra.mxu0 0
        %554 = vmatprep.mubr.bf16.mxu0 0
        %555 = vmatmul.mubr.bf16.gmra.mrb[0].mxu0 %v378
        %v556 = vpop.f32.mrb[0].mxu0
        %v557 = vadd.f32 %v334, %v556
        %v558 = vpop.f32.mrb[0].mxu0
        %v559 = vadd.f32 %v338, %v558
        %v560 = vpop.f32.mrb[0].mxu0
        %v561 = vadd.f32 %v334, %v560
        %v562 = vpop.f32.mrb[0].mxu0
        %v563 = vadd.f32 %v338, %v562
        %564 = vmatprep.mubr.bf16.mxu0 0
        %565 = vmatmul.mubr.bf16.gmra.mrb[0].mxu0 %v379
        %v566 = vpop.f32.mrb[0].mxu0
        %v567 = vadd.f32 %v334, %v566
        %v568 = vpop.f32.mrb[0].mxu0
        %v569 = vadd.f32 %v338, %v568
        %v570 = vpop.f32.mrb[0].mxu0
        %v571 = vadd.f32 %v334, %v570
        %v572 = vpop.f32.mrb[0].mxu0
        %v573 = vadd.f32 %v338, %v572
        %574 = vmatprep.mubr.bf16.mxu0 0
        %575 = vmatmul.mubr.bf16.gmra.mrb[0].mxu0 %v380
        %v576 = vpop.f32.mrb[0].mxu0
        %v577 = vadd.f32 %v334, %v576
        %v578 = vpop.f32.mrb[0].mxu0
        %v579 = vadd.f32 %v338, %v578
        %v580 = vpop.f32.mrb[0].mxu0
        %v581 = vadd.f32 %v334, %v580
        %v582 = vpop.f32.mrb[0].mxu0
        %v583 = vadd.f32 %v338, %v582
        %584 = vmatprep.mubr.bf16.mxu0 0
        %585 = vmatmul.mubr.bf16.gmra.mrb[0].mxu0 %v381
        %v586 = vpop.f32.mrb[0].mxu0
        %v587 = vadd.f32 %v334, %v586
        %v588 = vpop.f32.mrb[0].mxu0
        %v589 = vadd.f32 %v338, %v588
        %v590 = vpop.f32.mrb[0].mxu0
        %v591 = vadd.f32 %v334, %v590
        %v592 = vpop.f32.mrb[0].mxu0
        %v593 = vadd.f32 %v338, %v592
        %594 = vmatprep.mubr.bf16.mxu0 0
        %595 = vmatmul.mubr.bf16.gmra.mrb[0].mxu0 %v382
        %v596 = vpop.f32.mrb[0].mxu0
        %v597 = vadd.f32 %v334, %v596
        %v598 = vpop.f32.mrb[0].mxu0
        %v599 = vadd.f32 %v338, %v598
        %v600 = vpop.f32.mrb[0].mxu0
        %v601 = vadd.f32 %v334, %v600
        %v602 = vpop.f32.mrb[0].mxu0
        %v603 = vadd.f32 %v338, %v602
        %604 = vmatprep.mubr.bf16.mxu0 0
        %605 = vmatmul.mubr.bf16.gmra.mrb[0].mxu0 %v383
        %v606 = vpop.f32.mrb[0].mxu0
        %v607 = vadd.f32 %v334, %v606
        %v608 = vpop.f32.mrb[0].mxu0
        %v609 = vadd.f32 %v338, %v608
        %v610 = vpop.f32.mrb[0].mxu0
        %v611 = vadd.f32 %v334, %v610
        %v612 = vpop.f32.mrb[0].mxu0
        %v613 = vadd.f32 %v338, %v612
        %614 = vmatprep.mubr.bf16.mxu0 0
        %615 = vmatmul.mubr.bf16.gmra.mrb[0].mxu0 %v384
        %v616 = vpop.f32.mrb[0].mxu0
        %v617 = vadd.f32 %v334, %v616
        %v618 = vpop.f32.mrb[0].mxu0
        %v619 = vadd.f32 %v338, %v618
        %v620 = vpop.f32.mrb[0].mxu0
        %v621 = vadd.f32 %v334, %v620
        %v622 = vpop.f32.mrb[0].mxu0
        %v623 = vadd.f32 %v338, %v622
        %624 = vmatprep.mubr.bf16.mxu0 0
        %625 = vmatmul.mubr.bf16.gmra.mrb[0].mxu0 %v385
        %v626 = vpop.f32.mrb[0].mxu0
        %v627 = vadd.f32 %v334, %v626
        %v628 = vpop.f32.mrb[0].mxu0
        %v629 = vadd.f32 %v338, %v628
        %v630 = vpop.f32.mrb[0].mxu0
        %v631 = vadd.f32 %v334, %v630
        %v632 = vpop.f32.mrb[0].mxu0
        %v633 = vadd.f32 %v338, %v632
        %634 = vdwg.mxu0
        %635 = vmatprep.subr.bf16.mxu0 0
        %636 = vmatpush1.bf16.msra.mxu0 %v476
        %637 = vmatprep.subr.bf16.mxu0 0
        %638 = vmatpush1.bf16.msra.mxu0 %v479
        %639 = vmatprep.subr.bf16.mxu0 0
        %640 = vmatpush1.bf16.msra.mxu0 %v482
        %641 = vmatprep.subr.bf16.mxu0 0
        %642 = vmatpush1.bf16.msra.mxu0 %v485
        %643 = vmatprep.subr.bf16.mxu0 0
        %644 = vmatpush1.bf16.msra.mxu0 %v488
        %645 = vmatprep.subr.bf16.mxu0 0
        %646 = vmatpush1.bf16.msra.mxu0 %v491
        %647 = vmatprep.subr.bf16.mxu0 0
        %648 = vmatpush1.bf16.msra.mxu0 %v494
        %649 = vmatprep.subr.bf16.mxu0 0
        %650 = vmatpush1.bf16.msra.mxu0 %v497
        %651 = vmatprep.subr.bf16.mxu0 0
        %652 = vmatpush1.bf16.msra.mxu0 0
        %653 = vmatprep.subr.bf16.mxu0 0
        %654 = vmatpush1.bf16.msra.mxu0 0
        %655 = vmatprep.subr.bf16.mxu0 0
        %656 = vmatpush1.bf16.msra.mxu0 0
        %657 = vmatprep.subr.bf16.mxu0 0
        %658 = vmatpush1.bf16.msra.mxu0 0
        %659 = vmatprep.subr.bf16.mxu0 0
        %660 = vmatpush1.bf16.msra.mxu0 0
        %661 = vmatprep.subr.bf16.mxu0 0
        %662 = vmatpush1.bf16.msra.mxu0 0
        %663 = vmatprep.subr.bf16.mxu0 0
        %664 = vmatpush1.bf16.msra.mxu0 0
        %665 = vmatprep.subr.bf16.mxu0 0
        %666 = vmatpush1.bf16.msra.mxu0 0
        %667 = vmatprep.mubr.bf16.mxu0 0
        %668 = vmatmul.mubr.bf16.gmra.mrb[0].mxu0 %v378
        %v669 = vpop.f32.mrb[0].mxu0
        %v670 = vadd.f32 %v342, %v669
        %v671 = vpop.f32.mrb[0].mxu0
        %v672 = vpop.f32.mrb[0].mxu0
        %v673 = vadd.f32 %v342, %v672
        %v674 = vpop.f32.mrb[0].mxu0
        %675 = vmatprep.mubr.bf16.mxu0 0
        %676 = vmatmul.mubr.bf16.gmra.mrb[0].mxu0 %v379
        %v677 = vpop.f32.mrb[0].mxu0
        %v678 = vadd.f32 %v342, %v677
        %v679 = vpop.f32.mrb[0].mxu0
        %v680 = vpop.f32.mrb[0].mxu0
        %v681 = vadd.f32 %v342, %v680
        %v682 = vpop.f32.mrb[0].mxu0
        %683 = vmatprep.mubr.bf16.mxu0 0
        %684 = vmatmul.mubr.bf16.gmra.mrb[0].mxu0 %v380
        %v685 = vpop.f32.mrb[0].mxu0
        %v686 = vadd.f32 %v342, %v685
        %v687 = vpop.f32.mrb[0].mxu0
        %v688 = vpop.f32.mrb[0].mxu0
        %v689 = vadd.f32 %v342, %v688
        %v690 = vpop.f32.mrb[0].mxu0
        %691 = vmatprep.mubr.bf16.mxu0 0
        %692 = vmatmul.mubr.bf16.gmra.mrb[0].mxu0 %v381
        %v693 = vpop.f32.mrb[0].mxu0
        %v694 = vadd.f32 %v342, %v693
        %v695 = vpop.f32.mrb[0].mxu0
        %v696 = vpop.f32.mrb[0].mxu0
        %v697 = vadd.f32 %v342, %v696
        %v698 = vpop.f32.mrb[0].mxu0
        %699 = vmatprep.mubr.bf16.mxu0 0
        %700 = vmatmul.mubr.bf16.gmra.mrb[0].mxu0 %v382
        %v701 = vpop.f32.mrb[0].mxu0
        %v702 = vadd.f32 %v342, %v701
        %v703 = vpop.f32.mrb[0].mxu0
        %v704 = vpop.f32.mrb[0].mxu0
        %v705 = vadd.f32 %v342, %v704
        %v706 = vpop.f32.mrb[0].mxu0
        %707 = vmatprep.mubr.bf16.mxu0 0
        %708 = vmatmul.mubr.bf16.gmra.mrb[0].mxu0 %v383
        %v709 = vpop.f32.mrb[0].mxu0
        %v710 = vadd.f32 %v342, %v709
        %v711 = vpop.f32.mrb[0].mxu0
        %v712 = vpop.f32.mrb[0].mxu0
        %v713 = vadd.f32 %v342, %v712
        %v714 = vpop.f32.mrb[0].mxu0
        %715 = vmatprep.mubr.bf16.mxu0 0
        %716 = vmatmul.mubr.bf16.gmra.mrb[0].mxu0 %v384
        %v717 = vpop.f32.mrb[0].mxu0
        %v718 = vadd.f32 %v342, %v717
        %v719 = vpop.f32.mrb[0].mxu0
        %v720 = vpop.f32.mrb[0].mxu0
        %v721 = vadd.f32 %v342, %v720
        %v722 = vpop.f32.mrb[0].mxu0
        %723 = vmatprep.mubr.bf16.mxu0 0
        %724 = vmatmul.mubr.bf16.gmra.mrb[0].mxu0 %v385
        %v725 = vpop.f32.mrb[0].mxu0
        %v726 = vadd.f32 %v342, %v725
        %v727 = vpop.f32.mrb[0].mxu0
        %v728 = vpop.f32.mrb[0].mxu0
        %v729 = vadd.f32 %v342, %v728
        %v730 = vpop.f32.mrb[0].mxu0
        %731 = vdwg.mxu0
        %v732 = vpack.c.bf16 %v561, %v557
        %v733 = vpack.c.bf16 %v571, %v567
        %v734 = vpack.c.bf16 %v581, %v577
        %v735 = vpack.c.bf16 %v591, %v587
        %v736 = vpack.c.bf16 %v601, %v597
        %v737 = vpack.c.bf16 %v611, %v607
        %v738 = vpack.c.bf16 %v621, %v617
        %v739 = vpack.c.bf16 %v631, %v627
        %v748 = vunpack.c.l.b16 %v732
        %v749 = vunpack.c.h.b16 %v732
        %v750 = vunpack.c.l.b16 %v733
        %v751 = vunpack.c.h.b16 %v733
        %v752 = vunpack.c.l.b16 %v734
        %v753 = vunpack.c.h.b16 %v734
        %v754 = vunpack.c.l.b16 %v735
        %v755 = vunpack.c.h.b16 %v735
        %v756 = vunpack.c.l.b16 %v736
        %v757 = vunpack.c.h.b16 %v736
        %v758 = vunpack.c.l.b16 %v737
        %v759 = vunpack.c.h.b16 %v737
        %v760 = vunpack.c.l.b16 %v738
        %v761 = vunpack.c.h.b16 %v738
        %v762 = vunpack.c.l.b16 %v739
        %v763 = vunpack.c.h.b16 %v739
        %v764 = vpack.c.b16 %v748, %v748
        %v765 = vpack.c.b16 %v749, %v749
        %v766 = vpack.c.b16 %v750, %v750
        %v767 = vpack.c.b16 %v751, %v751
        %v768 = vpack.c.b16 %v752, %v752
        %v769 = vpack.c.b16 %v753, %v753
        %v770 = vpack.c.b16 %v754, %v754
        %v771 = vpack.c.b16 %v755, %v755
        %v772 = vpack.c.b16 %v756, %v756
        %v773 = vpack.c.b16 %v757, %v757
        %v774 = vpack.c.b16 %v758, %v758
        %v775 = vpack.c.b16 %v759, %v759
        %v776 = vpack.c.b16 %v760, %v760
        %v777 = vpack.c.b16 %v761, %v761
        %v778 = vpack.c.b16 %v762, %v762
        %v779 = vpack.c.b16 %v763, %v763
        %796 = vst [vmem:[%s261] sm:$0xf] %v764
        %797 = vst [vmem:[%s261 + $0x4] sm:$0xf] %v765
        %798 = vst [vmem:[%s261 + $0x8] sm:$0xf] %v766
        %799 = vst [vmem:[%s261 + $0xc] sm:$0xf] %v767
        %800 = vst [vmem:[%s261 + $0x10] sm:$0xf] %v768
        %801 = vst [vmem:[%s261 + $0x14] sm:$0xf] %v769
        %802 = vst [vmem:[%s261 + $0x18] sm:$0xf] %v770
        %803 = vst [vmem:[%s261 + $0x1c] sm:$0xf] %v771
        %804 = vst [vmem:[%s261 + $0x20] sm:$0xf] %v772
        %805 = vst [vmem:[%s261 + $0x24] sm:$0xf] %v773
        %806 = vst [vmem:[%s261 + $0x28] sm:$0xf] %v774
        %807 = vst [vmem:[%s261 + $0x2c] sm:$0xf] %v775
        %808 = vst [vmem:[%s261 + $0x30] sm:$0xf] %v776
        %809 = vst [vmem:[%s261 + $0x34] sm:$0xf] %v777
        %810 = vst [vmem:[%s261 + $0x38] sm:$0xf] %v778
        %811 = vst [vmem:[%s261 + $0x3c] sm:$0xf] %v779
        %v812 = vpack.c.bf16 %v563, %v559
        %v813 = vpack.c.bf16 %v573, %v569
        %v814 = vpack.c.bf16 %v583, %v579
        %v815 = vpack.c.bf16 %v593, %v589
        %v816 = vpack.c.bf16 %v603, %v599
        %v817 = vpack.c.bf16 %v613, %v609
        %v818 = vpack.c.bf16 %v623, %v619
        %v819 = vpack.c.bf16 %v633, %v629
        %v828 = vunpack.c.l.b16 %v812
        %v829 = vunpack.c.h.b16 %v812
        %v830 = vunpack.c.l.b16 %v813
        %v831 = vunpack.c.h.b16 %v813
        %v832 = vunpack.c.l.b16 %v814
        %v833 = vunpack.c.h.b16 %v814
        %v834 = vunpack.c.l.b16 %v815
        %v835 = vunpack.c.h.b16 %v815
        %v836 = vunpack.c.l.b16 %v816
        %v837 = vunpack.c.h.b16 %v816
        %v838 = vunpack.c.l.b16 %v817
        %v839 = vunpack.c.h.b16 %v817
        %v840 = vunpack.c.l.b16 %v818
        %v841 = vunpack.c.h.b16 %v818
        %v842 = vunpack.c.l.b16 %v819
        %v843 = vunpack.c.h.b16 %v819
        %v844 = vpack.c.b16 %v828, %v828
        %v845 = vpack.c.b16 %v829, %v829
        %v846 = vpack.c.b16 %v830, %v830
        %v847 = vpack.c.b16 %v831, %v831
        %v848 = vpack.c.b16 %v832, %v832
        %v849 = vpack.c.b16 %v833, %v833
        %v850 = vpack.c.b16 %v834, %v834
        %v851 = vpack.c.b16 %v835, %v835
        %v852 = vpack.c.b16 %v836, %v836
        %v853 = vpack.c.b16 %v837, %v837
        %v854 = vpack.c.b16 %v838, %v838
        %v855 = vpack.c.b16 %v839, %v839
        %v856 = vpack.c.b16 %v840, %v840
        %v857 = vpack.c.b16 %v841, %v841
        %v858 = vpack.c.b16 %v842, %v842
        %v859 = vpack.c.b16 %v843, %v843
        %876 = vst [vmem:[%s268] sm:$0xf] %v844
        %877 = vst [vmem:[%s268 + $0x4] sm:$0xf] %v845
        %878 = vst [vmem:[%s268 + $0x8] sm:$0xf] %v846
        %879 = vst [vmem:[%s268 + $0xc] sm:$0xf] %v847
        %880 = vst [vmem:[%s268 + $0x10] sm:$0xf] %v848
        %881 = vst [vmem:[%s268 + $0x14] sm:$0xf] %v849
        %882 = vst [vmem:[%s268 + $0x18] sm:$0xf] %v850
        %883 = vst [vmem:[%s268 + $0x1c] sm:$0xf] %v851
        %884 = vst [vmem:[%s268 + $0x20] sm:$0xf] %v852
        %885 = vst [vmem:[%s268 + $0x24] sm:$0xf] %v853
        %886 = vst [vmem:[%s268 + $0x28] sm:$0xf] %v854
        %887 = vst [vmem:[%s268 + $0x2c] sm:$0xf] %v855
        %888 = vst [vmem:[%s268 + $0x30] sm:$0xf] %v856
        %889 = vst [vmem:[%s268 + $0x34] sm:$0xf] %v857
        %890 = vst [vmem:[%s268 + $0x38] sm:$0xf] %v858
        %891 = vst [vmem:[%s268 + $0x3c] sm:$0xf] %v859
        %v892 = vpack.c.bf16 %v673, %v670
        %v893 = vpack.c.bf16 %v681, %v678
        %v894 = vpack.c.bf16 %v689, %v686
        %v895 = vpack.c.bf16 %v697, %v694
        %v896 = vpack.c.bf16 %v705, %v702
        %v897 = vpack.c.bf16 %v713, %v710
        %v898 = vpack.c.bf16 %v721, %v718
        %v899 = vpack.c.bf16 %v729, %v726
        %v908 = vunpack.c.l.b16 %v892
        %v909 = vunpack.c.h.b16 %v892
        %v910 = vunpack.c.l.b16 %v893
        %v911 = vunpack.c.h.b16 %v893
        %v912 = vunpack.c.l.b16 %v894
        %v913 = vunpack.c.h.b16 %v894
        %v914 = vunpack.c.l.b16 %v895
        %v915 = vunpack.c.h.b16 %v895
        %v916 = vunpack.c.l.b16 %v896
        %v917 = vunpack.c.h.b16 %v896
        %v918 = vunpack.c.l.b16 %v897
        %v919 = vunpack.c.h.b16 %v897
        %v920 = vunpack.c.l.b16 %v898
        %v921 = vunpack.c.h.b16 %v898
        %v922 = vunpack.c.l.b16 %v899
        %v923 = vunpack.c.h.b16 %v899
        %v924 = vpack.c.b16 %v908, %v908
        %v925 = vpack.c.b16 %v909, %v909
        %v926 = vpack.c.b16 %v910, %v910
        %v927 = vpack.c.b16 %v911, %v911
        %v928 = vpack.c.b16 %v912, %v912
        %v929 = vpack.c.b16 %v913, %v913
        %v930 = vpack.c.b16 %v914, %v914
        %v931 = vpack.c.b16 %v915, %v915
        %v932 = vpack.c.b16 %v916, %v916
        %v933 = vpack.c.b16 %v917, %v917
        %v934 = vpack.c.b16 %v918, %v918
        %v935 = vpack.c.b16 %v919, %v919
        %v936 = vpack.c.b16 %v920, %v920
        %v937 = vpack.c.b16 %v921, %v921
        %v938 = vpack.c.b16 %v922, %v922
        %v939 = vpack.c.b16 %v923, %v923
        %956 = vst [vmem:[%s275] sm:$0xf] %v924
        %957 = vst [vmem:[%s275 + $0x4] sm:$0xf] %v925
        %958 = vst [vmem:[%s275 + $0x8] sm:$0xf] %v926
        %959 = vst [vmem:[%s275 + $0xc] sm:$0xf] %v927
        %960 = vst [vmem:[%s275 + $0x10] sm:$0xf] %v928
        %961 = vst [vmem:[%s275 + $0x14] sm:$0xf] %v929
        %962 = vst [vmem:[%s275 + $0x18] sm:$0xf] %v930
        %963 = vst [vmem:[%s275 + $0x1c] sm:$0xf] %v931
        %964 = vst [vmem:[%s275 + $0x20] sm:$0xf] %v932
        %965 = vst [vmem:[%s275 + $0x24] sm:$0xf] %v933
        %966 = vst [vmem:[%s275 + $0x28] sm:$0xf] %v934
        %967 = vst [vmem:[%s275 + $0x2c] sm:$0xf] %v935
        %968 = vst [vmem:[%s275 + $0x30] sm:$0xf] %v936
        %969 = vst [vmem:[%s275 + $0x34] sm:$0xf] %v937
        %970 = vst [vmem:[%s275 + $0x38] sm:$0xf] %v938
        %971 = vst [vmem:[%s275 + $0x3c] sm:$0xf] %v939
        %s972 = sand.u32 %s103, 1
        %s973 = scalar_lea.sflag [#allocation4], %s972
        %s974 = sand.u32 %s103, 1
        %s975 = smul.addr %s974, 64
        %s976 = scalar_lea.vmem [#allocation7], %s975
        %s977 = sand.u32 %s27, 1
        %s978 = scalar_lea.sflag [#allocation9], %s977
        %s979 = sand.u32 %s129, 1
        %s980 = smul.addr %s979, 64
        %s981 = scalar_lea.vmem [#allocation8], %s980
        %s982 = sand.u32 %s27, 1
        %s983 = scalar_lea.sflag [#allocation9], %s982
        %s984 = sand.u32 %s155, 1
        %s985 = smul.addr %s984, 64
        %s986 = scalar_lea.vmem [#allocation10], %s985
        // Predicated region
        $region41: #{tpu_custom_call.1} parent=31 // pred_check
          %p987 = pneg %p113
        $region42: #{tpu_custom_call.1} parent=31 // pred_check_branch
          %989 = sbr.rel (%p987) target = $region44
        $region43: #{tpu_custom_call.1} parent=31 // pred_region
          %s990 = smul.u32 16, %s27
          %s992 = ssub.s32 1024, 1024
          %993 = vsyncadd %s973, %s992
          %s994 = smul.addr %s990, 64
          %s995 = scalar_lea.hbm %s3, %s994
          %s996 = sshll.u32 %s976, 4
          %s997 = int_to_ptr.vmem [resolvable:$true] %s996
          %1002 = dma.vmem_to_hbm [thread:$0]  %s997, 1024, %s995, %s973, 64, 64, 4
        $region44: #{tpu_custom_call.1} parent=31 // pred_fallthru
          _
        // Predicated region
        $region45: #{tpu_custom_call.1} parent=31 // pred_check
          %p1003 = pneg %p139
        $region46: #{tpu_custom_call.1} parent=31 // pred_check_branch
          %1005 = sbr.rel (%p1003) target = $region48
        $region47: #{tpu_custom_call.1} parent=31 // pred_region
          %s1006 = smul.u32 16, %s27
          %s1008 = ssub.s32 1024, 1024
          %1009 = vsyncadd %s978, %s1008
          %s1010 = smul.addr %s1006, 64
          %s1011 = scalar_lea.hbm %s4, %s1010
          %s1012 = sshll.u32 %s981, 4
          %s1013 = int_to_ptr.vmem [resolvable:$true] %s1012
          %1018 = dma.vmem_to_hbm [thread:$0]  %s1013, 1024, %s1011, %s978, 64, 64, 4
        $region48: #{tpu_custom_call.1} parent=31 // pred_fallthru
          _
        // Predicated region
        $region49: #{tpu_custom_call.1} parent=31 // pred_check
          %p1019 = pneg %p165
        $region50: #{tpu_custom_call.1} parent=31 // pred_check_branch
          %1021 = sbr.rel (%p1019) target = $region52
        $region51: #{tpu_custom_call.1} parent=31 // pred_region
          %s1022 = smul.u32 16, %s27
          %s1024 = ssub.s32 1024, 1024
          %1025 = vsyncadd %s983, %s1024
          %s1026 = smul.addr %s1022, 64
          %s1027 = scalar_lea.hbm %s5, %s1026
          %s1028 = sshll.u32 %s986, 4
          %s1029 = int_to_ptr.vmem [resolvable:$true] %s1028
          %1034 = dma.vmem_to_hbm [thread:$0]  %s1029, 1024, %s1027, %s983, 64, 64, 4
        $region52: #{tpu_custom_call.1} parent=31 // pred_fallthru
          _
      $region32: #{tpu_custom_call.1} parent=5 // pred_fallthru
        _
      %p1035 = scmp.le.s32.totalorder 2, %s22
      // Predicated region
      $region53: #{tpu_custom_call.1} parent=5 // pred_check
        %p1036 = pneg %p1035
      $region54: #{tpu_custom_call.1} parent=5 // pred_check_branch
        %1038 = sbr.rel (%p1036) target = $region56
      $region55: #{tpu_custom_call.1} parent=5 // pred_region
        %s1039 = ssub.s32 %s22, 2
        // Predicated region
        $region57: #{tpu_custom_call.1} parent=55 // pred_check
          %p1040 = pneg %p119
        $region58: #{tpu_custom_call.1} parent=55 // pred_check_branch
          %1042 = sbr.rel (%p1040) target = $region60
        $region59: #{tpu_custom_call.1} parent=55 // pred_region
          %s1043 = sand.u32 %s104, 1
          %s1044 = scalar_lea.sflag [#allocation4], %s1043
          %s1045 = sand.u32 %s104, 1
          %s1046 = smul.addr %s1045, 64
          %s1047 = scalar_lea.vmem [#allocation7], %s1046
          %1048 = dma.done %s1044, 1024
        $region60: #{tpu_custom_call.1} parent=55 // pred_fallthru
          _
        // Predicated region
        $region61: #{tpu_custom_call.1} parent=55 // pred_check
          %p1049 = pneg %p145
        $region62: #{tpu_custom_call.1} parent=55 // pred_check_branch
          %1051 = sbr.rel (%p1049) target = $region64
        $region63: #{tpu_custom_call.1} parent=55 // pred_region
          %s1052 = sand.u32 %s28, 1
          %s1053 = scalar_lea.sflag [#allocation9], %s1052
          %s1054 = sand.u32 %s130, 1
          %s1055 = smul.addr %s1054, 64
          %s1056 = scalar_lea.vmem [#allocation8], %s1055
          %1057 = dma.done %s1053, 1024
        $region64: #{tpu_custom_call.1} parent=55 // pred_fallthru
          _
        // Predicated region
        $region65: #{tpu_custom_call.1} parent=55 // pred_check
          %p1058 = pneg %p171
        $region66: #{tpu_custom_call.1} parent=55 // pred_check_branch
          %1060 = sbr.rel (%p1058) target = $region68
        $region67: #{tpu_custom_call.1} parent=55 // pred_region
          %s1061 = sand.u32 %s28, 1
          %s1062 = scalar_lea.sflag [#allocation9], %s1061
          %s1063 = sand.u32 %s156, 1
          %s1064 = smul.addr %s1063, 64
          %s1065 = scalar_lea.vmem [#allocation10], %s1064
          %1066 = dma.done %s1062, 1024
        $region68: #{tpu_custom_call.1} parent=55 // pred_fallthru
          _
      $region56: #{tpu_custom_call.1} parent=5 // pred_fallthru
        _
    $region6: #{tpu_custom_call.1} parent=1 // loop_footer
      %s26 = sadd.s32 1, %s22
    $region7: #{tpu_custom_call.1} parent=1 // loop_footer_branch
      %21 = sbr.rel target = $region3
    $region8: #{tpu_custom_call.1} parent=1 // loop_exit
      _
    %1067 = vsyncpa [#allocation3], 1
    %s1068 = scalar_lea.sflag [#allocation3], 1
    %1069 = vsyncpa %s1068, 1
    %1070 = vsyncpa [#allocation6], 1
    %1071 = vsyncpa [#allocation4], 1
    %s1072 = scalar_lea.sflag [#allocation4], 1
    %1073 = vsyncpa %s1072, 1
    %1074 = vsyncpa [#allocation9], 1
    %s1075 = scalar_lea.sflag [#allocation9], 1
    %1076 = vsyncpa %s1075, 1

</llo_original>
